<compile_context>
chip_gen: v5e
topology: v5e:2x2
jax: 0.10.0
libtpu: 0.0.40
codegen_flags: <defaults>
</compile_context>

<pallas_src>
import math

import jax
import jax.numpy as jnp
from jax.experimental import pallas as pl
from jax.experimental.pallas import tpu as pltpu

_SMOOTH = 1e-5
_LANE = 128


def _bce_dice_partial_kernel(x_ref, t_ref, part_ref, bce_ref, inter_ref, sxt_ref):
    """Accumulate per-sample lane-parallel partial sums for BCE + soft dice.

    x_ref, t_ref : (N, TILE_R, 128) input blocks (native dtype; math in f32).
    part_ref     : (1, 3, N, 128) f32 output block for this split:
                   [bce_sum, intersection_sum, sum_x + sum_t] lane-partials.
    """
    j = pl.program_id(1)

    @pl.when(j == 0)
    def _init():
        bce_ref[...] = jnp.zeros_like(bce_ref)
        inter_ref[...] = jnp.zeros_like(inter_ref)
        sxt_ref[...] = jnp.zeros_like(sxt_ref)

    # Cast AFTER the load; all accumulation stays f32 (v5e has no bf16 VALU/EUP).
    x = x_ref[...].astype(jnp.float32)            # (N, TILE_R, 128)
    t = t_ref[...].astype(jnp.float32)
    xt = x * t                                     # reused by BCE and intersection

    # Numerically-stable BCE-with-logits (log1p form, matches torch).
    bce_el = jnp.maximum(x, 0.0) - xt + jnp.log1p(jnp.exp(-jnp.abs(x)))

    # Sublane (axis=1) reduce only; the 128-lane reduce is deferred to the tiny
    # wrapper epilogue. Lane-parallel f32 partials also reduce rounding drift.
    bce_ref[...] += jnp.sum(bce_el, axis=1)
    inter_ref[...] += jnp.sum(xt, axis=1)
    sxt_ref[...] += jnp.sum(x + t, axis=1)

    @pl.when(j == pl.num_programs(1) - 1)
    def _finalize():
        part_ref[0, 0, :, :] = bce_ref[...]
        part_ref[0, 1, :, :] = inter_ref[...]
        part_ref[0, 2, :, :] = sxt_ref[...]


def _largest_divisor(r, cap, step):
    """Largest t <= cap with t % step == 0 and r % t == 0 (0 if none)."""
    t = (min(cap, r) // step) * step
    while t >= step:
        if r % t == 0:
            return t
        t -= step
    return 0


def bce_dice_loss(input_logits, target, *, tile_budget_bytes=None):
    """input_logits, target: (N, ...) same shape. Returns scalar f32 loss.

    Feed bf16 logits / bf16 (or int8/bool) 0-1 masks to minimize HBM traffic;
    all kernel arithmetic is f32.
    """
    assert input_logits.shape == target.shape
    n = input_logits.shape[0]
    d = int(math.prod(input_logits.shape[1:])) if input_logits.ndim > 1 else 1

    x2 = input_logits.reshape(n, d)
    t2 = target.reshape(n, d)                     # native dtype: no wrapper upcast pass

    x_item = jnp.dtype(x2.dtype).itemsize
    t_item = jnp.dtype(t2.dtype).itemsize
    max_item = max(x_item, t_item)
    sub = 16 if max_item <= 2 else 8              # preferred sublane multiple

    # ---- device-aware budgets ------------------------------------------------
    try:
        vmem_cap = int(pltpu.get_tpu_info().vmem_capacity_bytes)
    except Exception:
        vmem_cap = 64 * 1024 * 1024               # conservative (v7x per-TC VMEM)
    if tile_budget_bytes is None:
        # ~8 MiB per input block on 128 MiB VMEM chips (v5e/v6e), ~4 MiB on v7x.
        tile_budget_bytes = (8 if vmem_cap >= 100 * 1024 * 1024 else 4) * 1024 * 1024

    # ---- tiling: lane fixed at 128, avoid padding whenever divisors allow ----
    lane = _LANE
    r = pl.cdiv(d, lane)                          # rows of the (n, r, 128) view
    rows_cap = max(1, tile_budget_bytes // (n * lane * max_item))

    if r <= rows_cap:
        tile_rows, r_pad = r, r                   # single tile along R (full dim)
    else:
        tile_rows = (_largest_divisor(r, rows_cap, sub)
                     or _largest_divisor(r, rows_cap, 8))
        if tile_rows:
            r_pad = r                             # divisor-friendly: no padding
        else:
            tile_rows = max(8, (rows_cap // 8) * 8)
            r_pad = pl.cdiv(r, tile_rows) * tile_rows

    d_pad = r_pad * lane
    if d_pad != d:
        # Unavoidable pad (d % 128 != 0 and/or no friendly divisor). Padded
        # zeros contribute exactly ln(2) each to the BCE sum and nothing to the
        # dice sums; corrected analytically in the epilogue (no in-kernel mask).
        x2 = jnp.pad(x2, ((0, 0), (0, d_pad - d)))
        t2 = jnp.pad(t2, ((0, 0), (0, d_pad - d)))
    x3 = x2.reshape(n, r_pad, lane)
    t3 = t2.reshape(n, r_pad, lane)

    num_tiles = r_pad // tile_rows
    # Shard the reduction across both TensorCores on v7x (no-op on 1-TC chips).
    num_splits = 2 if (num_tiles >= 2 and num_tiles % 2 == 0) else 1
    tiles_per_split = num_tiles // num_splits

    block_bytes = n * tile_rows * lane * (x_item + t_item)
    vmem_limit = max(16 * 1024 * 1024, 2 * block_bytes + 4 * 1024 * 1024)
    vmem_limit = int(min(vmem_limit,
                         max(16 * 1024 * 1024, vmem_cap - 8 * 1024 * 1024)))

    def in_map(i, j):
        return (0, i * tiles_per_split + j, 0)

    parts = pl.pallas_call(
        _bce_dice_partial_kernel,
        out_shape=jax.ShapeDtypeStruct((num_splits, 3, n, lane), jnp.float32),
        grid_spec=pltpu.PrefetchScalarGridSpec(
            num_scalar_prefetch=0,
            grid=(num_splits, tiles_per_split),
            in_specs=[
                pl.BlockSpec((n, tile_rows, lane), in_map),
                pl.BlockSpec((n, tile_rows, lane), in_map),
            ],
            out_specs=pl.BlockSpec((1, 3, n, lane), lambda i, j: (i, 0, 0, 0)),
            scratch_shapes=[
                pltpu.VMEM((n, lane), jnp.float32),   # BCE lane-partials
                pltpu.VMEM((n, lane), jnp.float32),   # intersection lane-partials
                pltpu.VMEM((n, lane), jnp.float32),   # sum_x + sum_t lane-partials
            ],
        ),
        compiler_params=pltpu.CompilerParams(
            dimension_semantics=("parallel", "arbitrary"),
            vmem_limit_bytes=vmem_limit,
        ),
    )(x3, t3)

    # ---- tiny epilogue (few hundred f32s): lane reduce + dice + 0.5*bce ------
    sums = jnp.sum(parts, axis=(0, 3))                        # (3, n)
    bce_sum = jnp.sum(sums[0])
    if d_pad != d:
        bce_sum = bce_sum - jnp.float32(n * (d_pad - d) * math.log(2.0))
    bce = bce_sum / jnp.float32(n * d)
    dice_per = (2.0 * sums[1] + _SMOOTH) / (sums[2] + _SMOOTH)
    dice = 1.0 - jnp.sum(dice_per) / jnp.float32(n)
    return 0.5 * bce + dice


def _reference(input_logits, target):
    """Pure-JAX reference mirroring the PyTorch module exactly (f32 math)."""
    x = input_logits.astype(jnp.float32)
    t = target.astype(jnp.float32)
    bce = jnp.mean(jnp.maximum(x, 0.0) - x * t + jnp.log1p(jnp.exp(-jnp.abs(x))))
    smooth = 1e-05
    n = x.shape[0]
    xf = x.reshape(n, -1)
    tf = t.reshape(n, -1)
    inter = jnp.sum(xf * tf, axis=1)
    dice = (2.0 * inter + smooth) / (jnp.sum(xf, axis=1) + jnp.sum(tf, axis=1) + smooth)
    dice = 1.0 - jnp.sum(dice) / n
    return 0.5 * bce + dice


if __name__ == "__main__":
    key = jax.random.PRNGKey(0)
    k1, k2 = jax.random.split(key)
    # NCHW segmentation logits + binary mask, fed as bf16 (halves HBM bytes on a
    # bandwidth-bound loss; 0/1 masks are exact in bf16, kernel math is f32).
    N, C, H, W = 2, 4, 16, 16
    logits = jax.random.normal(k1, (N, C, H, W), dtype=jnp.float32).astype(jnp.bfloat16)
    target = (jax.random.uniform(k2, (N, C, H, W)) > 0.5).astype(jnp.bfloat16)

    loss = bce_dice_loss(logits, target)
    jax.block_until_ready(loss)

    ref = _reference(logits, target)
    assert jnp.allclose(loss, ref, atol=1e-4, rtol=1e-4), (loss, ref)
    print("KERNEL_OK")
</pallas_src>

<mosaic_0001>
module attributes {stable_mosaic.version = 11 : i64} {
  func.func @_bce_dice_partial_kernel(%arg0: i32, %arg1: i32, %arg2: memref<2x8x128xbf16, #tpu.memory_space<vmem>>, %arg3: memref<2x8x128xbf16, #tpu.memory_space<vmem>>, %arg4: memref<1x3x2x128xf32, #tpu.memory_space<vmem>>, %arg5: memref<2x128xf32, #tpu.memory_space<vmem>>, %arg6: memref<2x128xf32, #tpu.memory_space<vmem>>, %arg7: memref<2x128xf32, #tpu.memory_space<vmem>>) attributes {dimension_semantics = [#tpu.dimension_semantics<parallel>, #tpu.dimension_semantics<arbitrary>], iteration_bounds = array<i64: 1, 1>, scalar_prefetch = 0 : i64, scratch_operands = 3 : i64, tpu.core_type = #tpu.core_type<tc>, window_params = [{transform_indices = @transform_0, window_bounds = array<i64: 2, 8, 128>}, {transform_indices = @transform_1, window_bounds = array<i64: 2, 8, 128>}, {transform_indices = @transform_2, window_bounds = array<i64: 1, 3, 2, 128>}]} {
    %c0_i32 = arith.constant 0 : i32
    %0 = arith.cmpi eq, %arg1, %c0_i32 : i32
    %1 = arith.extui %0 : i1 to i32
    %c0_i32_0 = arith.constant 0 : i32
    %2 = arith.cmpi ne, %1, %c0_i32_0 : i32
    scf.if %2 {
      %cst_24 = arith.constant 0.000000e+00 : f32
      %33 = vector.broadcast %cst_24 : f32 to vector<2x128xf32>
      %c0_25 = arith.constant 0 : index
      %c0_26 = arith.constant 0 : index
      %34 = vector.load %arg5[%c0_25, %c0_26] : memref<2x128xf32, #tpu.memory_space<vmem>>, vector<2x128xf32>
      tpu.vector_store %arg5[%c0_25, %c0_26], %33 {strides = array<i32>} : memref<2x128xf32, #tpu.memory_space<vmem>>, vector<2x128xf32>,
      %cst_27 = arith.constant 0.000000e+00 : f32
      %35 = vector.broadcast %cst_27 : f32 to vector<2x128xf32>
      %c0_28 = arith.constant 0 : index
      %c0_29 = arith.constant 0 : index
      %36 = vector.load %arg6[%c0_28, %c0_29] : memref<2x128xf32, #tpu.memory_space<vmem>>, vector<2x128xf32>
      tpu.vector_store %arg6[%c0_28, %c0_29], %35 {strides = array<i32>} : memref<2x128xf32, #tpu.memory_space<vmem>>, vector<2x128xf32>,
      %cst_30 = arith.constant 0.000000e+00 : f32
      %37 = vector.broadcast %cst_30 : f32 to vector<2x128xf32>
      %c0_31 = arith.constant 0 : index
      %c0_32 = arith.constant 0 : index
      %38 = vector.load %arg7[%c0_31, %c0_32] : memref<2x128xf32, #tpu.memory_space<vmem>>, vector<2x128xf32>
      tpu.vector_store %arg7[%c0_31, %c0_32], %37 {strides = array<i32>} : memref<2x128xf32, #tpu.memory_space<vmem>>, vector<2x128xf32>,
    } else {
    }
    %c0 = arith.constant 0 : index
    %c0_1 = arith.constant 0 : index
    %c0_2 = arith.constant 0 : index
    %3 = vector.load %arg2[%c0, %c0_1, %c0_2] : memref<2x8x128xbf16, #tpu.memory_space<vmem>>, vector<2x8x128xbf16>
    %4 = arith.extf %3 : vector<2x8x128xbf16> to vector<2x8x128xf32>
    %c0_3 = arith.constant 0 : index
    %c0_4 = arith.constant 0 : index
    %c0_5 = arith.constant 0 : index
    %5 = vector.load %arg3[%c0_3, %c0_4, %c0_5] : memref<2x8x128xbf16, #tpu.memory_space<vmem>>, vector<2x8x128xbf16>
    %6 = arith.extf %5 : vector<2x8x128xbf16> to vector<2x8x128xf32>
    %7 = arith.mulf %4, %6 : vector<2x8x128xf32>
    %cst = arith.constant 0.000000e+00 : f32
    %8 = vector.broadcast %cst : f32 to vector<2x8x128xf32>
    %9 = arith.maximumf %4, %8 : vector<2x8x128xf32>
    %10 = arith.subf %9, %7 : vector<2x8x128xf32>
    %11 = math.absf %4 : vector<2x8x128xf32>
    %cst_6 = arith.constant 0.000000e+00 : f32
    %12 = vector.broadcast %cst_6 : f32 to vector<2x8x128xf32>
    %13 = arith.subf %12, %11 : vector<2x8x128xf32>
    %14 = math.exp %13 : vector<2x8x128xf32>
    %15 = math.log1p %14 : vector<2x8x128xf32>
    %16 = arith.addf %10, %15 : vector<2x8x128xf32>
    %c0_7 = arith.constant 0 : index
    %c0_8 = arith.constant 0 : index
    %17 = vector.load %arg5[%c0_7, %c0_8] : memref<2x128xf32, #tpu.memory_space<vmem>>, vector<2x128xf32>
    %cst_9 = arith.constant dense<0.000000e+00> : vector<2x128xf32>
    %18 = vector.multi_reduction <add>, %16, %cst_9 [1] : vector<2x8x128xf32> to vector<2x128xf32>
    %19 = arith.addf %17, %18 : vector<2x128xf32>
    %c0_10 = arith.constant 0 : index
    %c0_11 = arith.constant 0 : index
    %20 = vector.load %arg5[%c0_10, %c0_11] : memref<2x128xf32, #tpu.memory_space<vmem>>, vector<2x128xf32>
    tpu.vector_store %arg5[%c0_10, %c0_11], %19 {strides = array<i32>} : memref<2x128xf32, #tpu.memory_space<vmem>>, vector<2x128xf32>,
    %c0_12 = arith.constant 0 : index
    %c0_13 = arith.constant 0 : index
    %21 = vector.load %arg6[%c0_12, %c0_13] : memref<2x128xf32, #tpu.memory_space<vmem>>, vector<2x128xf32>
    %cst_14 = arith.constant dense<0.000000e+00> : vector<2x128xf32>
    %22 = vector.multi_reduction <add>, %7, %cst_14 [1] : vector<2x8x128xf32> to vector<2x128xf32>
    %23 = arith.addf %21, %22 : vector<2x128xf32>
    %c0_15 = arith.constant 0 : index
    %c0_16 = arith.constant 0 : index
    %24 = vector.load %arg6[%c0_15, %c0_16] : memref<2x128xf32, #tpu.memory_space<vmem>>, vector<2x128xf32>
    tpu.vector_store %arg6[%c0_15, %c0_16], %23 {strides = array<i32>} : memref<2x128xf32, #tpu.memory_space<vmem>>, vector<2x128xf32>,
    %c0_17 = arith.constant 0 : index
    %c0_18 = arith.constant 0 : index
    %25 = vector.load %arg7[%c0_17, %c0_18] : memref<2x128xf32, #tpu.memory_space<vmem>>, vector<2x128xf32>
    %26 = arith.addf %4, %6 : vector<2x8x128xf32>
    %cst_19 = arith.constant dense<0.000000e+00> : vector<2x128xf32>
    %27 = vector.multi_reduction <add>, %26, %cst_19 [1] : vector<2x8x128xf32> to vector<2x128xf32>
    %28 = arith.addf %25, %27 : vector<2x128xf32>
    %c0_20 = arith.constant 0 : index
    %c0_21 = arith.constant 0 : index
    %29 = vector.load %arg7[%c0_20, %c0_21] : memref<2x128xf32, #tpu.memory_space<vmem>>, vector<2x128xf32>
    tpu.vector_store %arg7[%c0_20, %c0_21], %28 {strides = array<i32>} : memref<2x128xf32, #tpu.memory_space<vmem>>, vector<2x128xf32>,
    %c0_i32_22 = arith.constant 0 : i32
    %30 = arith.cmpi eq, %arg1, %c0_i32_22 : i32
    %31 = arith.extui %30 : i1 to i32
    %c0_i32_23 = arith.constant 0 : i32
    %32 = arith.cmpi ne, %31, %c0_i32_23 : i32
    scf.if %32 {
      %c0_24 = arith.constant 0 : index
      %c0_25 = arith.constant 0 : index
      %33 = vector.load %arg5[%c0_24, %c0_25] : memref<2x128xf32, #tpu.memory_space<vmem>>, vector<2x128xf32>
      %c0_26 = arith.constant 0 : index
      %c0_27 = arith.constant 0 : index
      %c0_28 = arith.constant 0 : index
      %c0_29 = arith.constant 0 : index
      %34 = vector.load %arg4[%c0_26, %c0_27, %c0_28, %c0_29] : memref<1x3x2x128xf32, #tpu.memory_space<vmem>>, vector<1x1x2x128xf32>
      %35 = vector.shape_cast %34 : vector<1x1x2x128xf32> to vector<2x128xf32>
      %36 = vector.shape_cast %33 : vector<2x128xf32> to vector<1x1x2x128xf32>
      tpu.vector_store %arg4[%c0_26, %c0_27, %c0_28, %c0_29], %36 {strides = array<i32>} : memref<1x3x2x128xf32, #tpu.memory_space<vmem>>, vector<1x1x2x128xf32>,
      %c0_30 = arith.constant 0 : index
      %c0_31 = arith.constant 0 : index
      %37 = vector.load %arg6[%c0_30, %c0_31] : memref<2x128xf32, #tpu.memory_space<vmem>>, vector<2x128xf32>
      %c0_32 = arith.constant 0 : index
      %c1 = arith.constant 1 : index
      %c0_33 = arith.constant 0 : index
      %c0_34 = arith.constant 0 : index
      %38 = vector.load %arg4[%c0_32, %c1, %c0_33, %c0_34] : memref<1x3x2x128xf32, #tpu.memory_space<vmem>>, vector<1x1x2x128xf32>
      %39 = vector.shape_cast %38 : vector<1x1x2x128xf32> to vector<2x128xf32>
      %40 = vector.shape_cast %37 : vector<2x128xf32> to vector<1x1x2x128xf32>
      tpu.vector_store %arg4[%c0_32, %c1, %c0_33, %c0_34], %40 {strides = array<i32>} : memref<1x3x2x128xf32, #tpu.memory_space<vmem>>, vector<1x1x2x128xf32>,
      %c0_35 = arith.constant 0 : index
      %c0_36 = arith.constant 0 : index
      %41 = vector.load %arg7[%c0_35, %c0_36] : memref<2x128xf32, #tpu.memory_space<vmem>>, vector<2x128xf32>
      %c0_37 = arith.constant 0 : index
      %c2 = arith.constant 2 : index
      %c0_38 = arith.constant 0 : index
      %c0_39 = arith.constant 0 : index
      %42 = vector.load %arg4[%c0_37, %c2, %c0_38, %c0_39] : memref<1x3x2x128xf32, #tpu.memory_space<vmem>>, vector<1x1x2x128xf32>
      %43 = vector.shape_cast %42 : vector<1x1x2x128xf32> to vector<2x128xf32>
      %44 = vector.shape_cast %41 : vector<2x128xf32> to vector<1x1x2x128xf32>
      tpu.vector_store %arg4[%c0_37, %c2, %c0_38, %c0_39], %44 {strides = array<i32>} : memref<1x3x2x128xf32, #tpu.memory_space<vmem>>, vector<1x1x2x128xf32>,
    } else {
    }
    return
  }
  func.func @transform_0(%arg0: i32, %arg1: i32) -> (i32, i32, i32) {
    %c1_i32 = arith.constant 1 : i32
    %0 = arith.muli %arg0, %c1_i32 : i32
    %1 = arith.addi %0, %arg1 : i32
    %c0_i32 = arith.constant 0 : i32
    %c0_i32_0 = arith.constant 0 : i32
    %c0_i32_1 = arith.constant 0 : i32
    return %c0_i32, %1, %c0_i32_0 : i32, i32, i32
  }
  func.func @transform_1(%arg0: i32, %arg1: i32) -> (i32, i32, i32) {
    %c1_i32 = arith.constant 1 : i32
    %0 = arith.muli %arg0, %c1_i32 : i32
    %1 = arith.addi %0, %arg1 : i32
    %c0_i32 = arith.constant 0 : i32
    %c0_i32_0 = arith.constant 0 : i32
    %c0_i32_1 = arith.constant 0 : i32
    return %c0_i32, %1, %c0_i32_0 : i32, i32, i32
  }
  func.func @transform_2(%arg0: i32, %arg1: i32) -> (i32, i32, i32, i32) {
    %c0_i32 = arith.constant 0 : i32
    %c0_i32_0 = arith.constant 0 : i32
    %c0_i32_1 = arith.constant 0 : i32
    %c0_i32_2 = arith.constant 0 : i32
    return %arg0, %c0_i32, %c0_i32_0, %c0_i32_1 : i32, i32, i32, i32
  }
}

</mosaic_0001>

<llo_original>
// kernel: tpu_custom_call.1
$region0: #{tpu_custom_call.1}
  #allocation0 [shape = 'u32[]', space=smem, size = 0x4, offset = 0x4, fixed_abs, tag = 'smem constant byte address 0x4 - core index']
  #allocation1 [shape = 'u32[72,128]{1,0:T(1,128)}', space=vmem, size = 0x9000, scoped, tag = 'internal scratch']
  #allocation2 [shape = 'f32[2,128]{1,0:T(2,128)}', space=vmem, size = 0x400, scoped, tag = 'scratch operand']
  #allocation3 [shape = 'f32[2,128]{1,0:T(2,128)}', space=vmem, size = 0x400, scoped, tag = 'scratch operand']
  #allocation4 [shape = 'f32[2,128]{1,0:T(2,128)}', space=vmem, size = 0x400, scoped, tag = 'scratch operand']
  %s0 = inlined_call_operand.hbm [shape: bf16[2,8,128], index: 0, kind: input, shape index: {}]
  %s1 = inlined_call_operand.hbm [shape: bf16[2,8,128], index: 1, kind: input, shape index: {}]
  %s2 = inlined_call_operand.hbm [shape: f32[1,3,2,128], index: 2, kind: output, shape index: {}]
  %s3 = sld [smem:[#allocation0]]
  $region34: #{tpu_custom_call.1} parent=0
    _
  %s5 = ssub.s32 1, %s3
  %s6 = scalar_select 0, %s5, %s3
  $region1: #{tpu_custom_call.1} parent=0
    #allocation5 [shape = 'u8[4096]{0}', space=vmem, size = 0x1000, scoped, tag = 'input window, operand 0, single buffered']
    #allocation6 [shape = 's32[1]{0}', space=sflag, size = 0x4, scoped, tag = 'scoped memory for tpu_custom_call.1']
    #allocation7 [shape = 's32[1]{0}', space=sflag, size = 0x4, scoped, tag = 'scoped memory for tpu_custom_call.1']
    #allocation8 [shape = 'u8[4096]{0}', space=vmem, size = 0x1000, scoped, tag = 'input window, operand 1, single buffered']
    #allocation9 [shape = 's32[1]{0}', space=sflag, size = 0x4, scoped, tag = 'scoped memory for tpu_custom_call.1']
    #allocation10 [shape = 'u8[3072]{0}', space=vmem, size = 0xc00, scoped, tag = 'output window, operand 0, single buffered']
    %7 = vsyncpa [#allocation6], 0
    %8 = vsyncpa [#allocation9], 0
    %9 = vsyncpa [#allocation7], 0
    // Predicated region
    $region2: #{tpu_custom_call.1} parent=1 // pred_check
      _
    $region3: #{tpu_custom_call.1} parent=1 // pred_check_branch
      %11 = sbr.rel (0) target = $region5
    $region4: #{tpu_custom_call.1} parent=1 // pred_region
      %s12 = sadd.s32 0, 0
      %14 = vsyncadd [#allocation6], 0
      %s15 = smul.addr %s12, 4
      %s16 = scalar_lea.hbm %s0, %s15
      %s17 = sshll.u32 %s16, 4
      %s18 = int_to_ptr.hbm [resolvable:$true] %s17
      %s19 = sshll.u32 [#allocation5], 4
      %s20 = int_to_ptr.vmem [resolvable:$true] %s19
      %25 = dma.hbm_to_vmem [thread:$0]  %s18, 128, %s20, [#allocation6], 64, 64, 4
    $region5: #{tpu_custom_call.1} parent=1 // pred_fallthru
      _
    // Predicated region
    $region6: #{tpu_custom_call.1} parent=1 // pred_check
      _
    $region7: #{tpu_custom_call.1} parent=1 // pred_check_branch
      %27 = sbr.rel (0) target = $region9
    $region8: #{tpu_custom_call.1} parent=1 // pred_region
      %s28 = sadd.s32 0, 0
      %30 = vsyncadd [#allocation9], 0
      %s31 = smul.addr %s28, 4
      %s32 = scalar_lea.hbm %s1, %s31
      %s33 = sshll.u32 %s32, 4
      %s34 = int_to_ptr.hbm [resolvable:$true] %s33
      %s35 = sshll.u32 [#allocation8], 4
      %s36 = int_to_ptr.vmem [resolvable:$true] %s35
      %41 = dma.hbm_to_vmem [thread:$0]  %s34, 128, %s36, [#allocation9], 64, 64, 4
    $region9: #{tpu_custom_call.1} parent=1 // pred_fallthru
      _
    // Predicated region
    $region10: #{tpu_custom_call.1} parent=1 // pred_check
      _
    $region11: #{tpu_custom_call.1} parent=1 // pred_check_branch
      %43 = sbr.rel (0) target = $region13
    $region12: #{tpu_custom_call.1} parent=1 // pred_region
      %45 = dma.done [#allocation6], 128
    $region13: #{tpu_custom_call.1} parent=1 // pred_fallthru
      _
    // Predicated region
    $region14: #{tpu_custom_call.1} parent=1 // pred_check
      _
    $region15: #{tpu_custom_call.1} parent=1 // pred_check_branch
      %47 = sbr.rel (0) target = $region17
    $region16: #{tpu_custom_call.1} parent=1 // pred_region
      %49 = dma.done [#allocation9], 128
    $region17: #{tpu_custom_call.1} parent=1 // pred_fallthru
      _
    %s50 = sadd.s32 0, 0
    %s51 = sadd.s32 0, 0
    %p52 = scmp.eq.s32.totalorder 0, 0
    // Predicated region
    $region18: #{tpu_custom_call.1} parent=1 // pred_check
      %p53 = pneg %p52
    $region19: #{tpu_custom_call.1} parent=1 // pred_check_branch
      %55 = sbr.rel (%p53) target = $region21
    $region20: #{tpu_custom_call.1} parent=1 // pred_region
      %56 = vst [vmem:[#allocation2] sm:$0x3] 0.0
      %57 = vst [vmem:[#allocation3] sm:$0x3] 0.0
      %58 = vst [vmem:[#allocation4] sm:$0x3] 0.0
    $region21: #{tpu_custom_call.1} parent=1 // pred_fallthru
      _
    %v59 = vld [vmem:[#allocation5] sm:$0xf]
    %v60 = vld [vmem:[#allocation5 + $0x4] sm:$0xf]
    %v61 = vunpack.c.l.bf16 %v59
    %v62 = vunpack.c.l.bf16 %v60
    %v63 = vld [vmem:[#allocation8] sm:$0xf]
    %v64 = vld [vmem:[#allocation8 + $0x4] sm:$0xf]
    %v65 = vunpack.c.l.bf16 %v63
    %v66 = vunpack.c.l.bf16 %v64
    %v67 = vmul.f32 %v61, %v65
    %v68 = vmul.f32 %v62, %v66
    %v69 = vmax.f32 %v61, 0.0
    %v70 = vmax.f32 %v62, 0.0
    %v71 = vsub.f32 %v69, %v67
    %v72 = vsub.f32 %v70, %v68
    %v73 = vand.u32 2147483647, %v61
    %v74 = vand.u32 2147483647, %v62
    %v75 = vsub.f32 0.0, %v73
    %v76 = vsub.f32 0.0, %v74
    %v77 = vmul.f32 %v75, 1.442695
    %v78 = vpow.pop %v77
    %v79 = vmul.f32 %v76, 1.442695
    %v80 = vpow.pop %v79
    %v81 = vadd.f32 %v78, 1.0
    %v82 = vlog2.pop %v81
    %v83 = vmul.f32 %v82, 0.6931472
    %v84 = vmul.f32 -0.5, %v78
    %v85 = vadd.f32 %v84, 1.0
    %v86 = vmul.f32 %v85, %v78
    %v87 = vand.u32 2147483647, %v78
    %vm88 = vcmp.lt.f32.partialorder %v87, 0.0004427343
    %v89 = vsel %vm88, %v86, %v83
    %v90 = vadd.f32 %v80, 1.0
    %v91 = vlog2.pop %v90
    %v92 = vmul.f32 %v91, 0.6931472
    %v93 = vmul.f32 -0.5, %v80
    %v94 = vadd.f32 %v93, 1.0
    %v95 = vmul.f32 %v94, %v80
    %v96 = vand.u32 2147483647, %v80
    %vm97 = vcmp.lt.f32.partialorder %v96, 0.0004427343
    %v98 = vsel %vm97, %v95, %v92
    %v99 = vadd.f32 %v71, %v89
    %v100 = vadd.f32 %v72, %v98
    %v101 = vld [vmem:[#allocation2] sm:$0x3]
    %v102 = vrot.slane %v99, 4
    %v103 = vadd.f32 %v99, %v102
    %v104 = vrot.slane %v103, 2
    %v105 = vadd.f32 %v103, %v104
    %v106 = vrot.slane %v105, 1
    %v107 = vadd.f32 %v105, %v106
    %v108 = vrot.slane %v100, 4
    %v109 = vadd.f32 %v100, %v108
    %v110 = vrot.slane %v109, 2
    %v111 = vadd.f32 %v109, %v110
    %v112 = vrot.slane %v111, 1
    %v113 = vadd.f32 %v111, %v112
    %vm116 = vcmask 1041409
    %v117 = vsel %vm116, %v113, %v107
    %v119 = vadd.f32 %v101, %v117
    %120 = vst [vmem:[#allocation2] sm:$0x3] %v119
    %v121 = vld [vmem:[#allocation3] sm:$0x3]
    %v122 = vrot.slane %v67, 4
    %v123 = vadd.f32 %v67, %v122
    %v124 = vrot.slane %v123, 2
    %v125 = vadd.f32 %v123, %v124
    %v126 = vrot.slane %v125, 1
    %v127 = vadd.f32 %v125, %v126
    %v128 = vrot.slane %v68, 4
    %v129 = vadd.f32 %v68, %v128
    %v130 = vrot.slane %v129, 2
    %v131 = vadd.f32 %v129, %v130
    %v132 = vrot.slane %v131, 1
    %v133 = vadd.f32 %v131, %v132
    %v136 = vsel %vm116, %v133, %v127
    %v138 = vadd.f32 %v121, %v136
    %139 = vst [vmem:[#allocation3] sm:$0x3] %v138
    %v140 = vld [vmem:[#allocation4] sm:$0x3]
    %v141 = vadd.f32 %v61, %v65
    %v142 = vadd.f32 %v62, %v66
    %v143 = vrot.slane %v141, 4
    %v144 = vadd.f32 %v141, %v143
    %v145 = vrot.slane %v144, 2
    %v146 = vadd.f32 %v144, %v145
    %v147 = vrot.slane %v146, 1
    %v148 = vadd.f32 %v146, %v147
    %v149 = vrot.slane %v142, 4
    %v150 = vadd.f32 %v142, %v149
    %v151 = vrot.slane %v150, 2
    %v152 = vadd.f32 %v150, %v151
    %v153 = vrot.slane %v152, 1
    %v154 = vadd.f32 %v152, %v153
    %v157 = vsel %vm116, %v154, %v148
    %v159 = vadd.f32 %v140, %v157
    %160 = vst [vmem:[#allocation4] sm:$0x3] %v159
    // Predicated region
    $region22: #{tpu_custom_call.1} parent=1 // pred_check
      %p161 = pneg %p52
    $region23: #{tpu_custom_call.1} parent=1 // pred_check_branch
      %163 = sbr.rel (%p161) target = $region25
    $region24: #{tpu_custom_call.1} parent=1 // pred_region
      %v164 = vld [vmem:[#allocation2] sm:$0x3]
      %165 = vst [vmem:[#allocation10] sm:$0x3] %v164
      %v166 = vld [vmem:[#allocation3] sm:$0x3]
      %s167 = scalar_lea.vmem [#allocation10], 2
      %168 = vst [vmem:[%s167] sm:$0x3] %v166
      %v169 = vld [vmem:[#allocation4] sm:$0x3]
      %s170 = scalar_lea.vmem [#allocation10], 4
      %171 = vst [vmem:[%s170] sm:$0x3] %v169
    $region25: #{tpu_custom_call.1} parent=1 // pred_fallthru
      _
    // Predicated region
    $region26: #{tpu_custom_call.1} parent=1 // pred_check
      _
    $region27: #{tpu_custom_call.1} parent=1 // pred_check_branch
      %173 = sbr.rel (0) target = $region29
    $region28: #{tpu_custom_call.1} parent=1 // pred_region
      %175 = vsyncadd [#allocation7], 0
      %s176 = sshll.u32 [#allocation10], 4
      %s177 = int_to_ptr.vmem [resolvable:$true] %s176
      %s178 = sshll.u32 %s2, 4
      %s179 = int_to_ptr.hbm [resolvable:$true] %s178
      %184 = dma.vmem_to_hbm [thread:$0]  %s177, 96, %s179, [#allocation7], 32, 32, 2
    $region29: #{tpu_custom_call.1} parent=1 // pred_fallthru
      _
    // Predicated region
    $region30: #{tpu_custom_call.1} parent=1 // pred_check
      _
    $region31: #{tpu_custom_call.1} parent=1 // pred_check_branch
      %186 = sbr.rel (0) target = $region33
    $region32: #{tpu_custom_call.1} parent=1 // pred_region
      %188 = dma.done [#allocation7], 96
    $region33: #{tpu_custom_call.1} parent=1 // pred_fallthru
      _
    %189 = vsyncpa [#allocation6], 1
    %190 = vsyncpa [#allocation9], 1
    %191 = vsyncpa [#allocation7], 1

</llo_original>
